<compile_context>
chip_gen: v7x
topology: tpu7x:2x2x1
jax: 0.10.0
libtpu: 0.0.40
codegen_flags: <defaults>
</compile_context>

<pallas_src>
import jax
import jax.numpy as jnp
from jax import lax
from jax.experimental import pallas as pl
from jax.experimental.pallas import tpu as pltpu


def _wave_probe_kernel(px_ref, py_ref, field_ref, out_ref):
    # px_ref, py_ref : VMEM (1, TP) int32 -- probe coords for this tile (lanes)
    # field_ref      : VMEM (B, H, W)     -- full wavefield, resident, 1-buffered
    # out_ref        : VMEM (B, TP)       -- lane-dense output tile
    B, H, W = field_ref.shape
    TP = px_ref.shape[1]

    px = px_ref[...]                                      # (1, TP) int32
    py = py_ref[...]                                      # (1, TP) int32

    # Column one-hot selector (W, TP): goes through the MXU so N = TP fills the
    # lane axis of the systolic array even when W is small.
    col_ids = lax.broadcasted_iota(jnp.int32, (W, TP), 0)
    col_sel = (col_ids == py).astype(field_ref.dtype)     # (W, TP)

    # Row pick mask (H, TP): VPU compare, sublane reduction on the XLU slot.
    row_ids = lax.broadcasted_iota(jnp.int32, (H, TP), 0)
    row_mask = row_ids == px                               # (H, TP) bool

    vals = []
    for b in range(B):                                     # B is static & small
        # rows[h, p] = field[b, h, py[p]]  -- exact gather with HIGHEST f32.
        rows = jnp.dot(
            field_ref[b], col_sel,
            preferred_element_type=jnp.float32,
            precision=lax.Precision.HIGHEST,
        )                                                  # (H, TP) f32
        picked = jnp.where(row_mask, rows, 0.0)            # keep only h == px[p]
        vals.append(jnp.sum(picked, axis=0, keepdims=True))  # (1, TP)

    # Single lane-dense writeback for the whole tile.
    out_ref[...] = jnp.concatenate(vals, axis=0).astype(out_ref.dtype)


def wave_probe(field, px, py, *, probe_tile=None):
    """field: (B, H, W); px, py: (P,) integer probe coordinates -> (B, P)."""
    B, H, W = field.shape
    P = int(px.shape[0])

    # int64 buffers in PyTorch; int32 suffices for addressing.  mod keeps
    # negative in-range indices PyTorch-compatible; truly out-of-range indices
    # wrap silently instead of raising like PyTorch would.
    px = jnp.mod(px.astype(jnp.int32), H)
    py = jnp.mod(py.astype(jnp.int32), W)

    if probe_tile is None:
        # 256 fills a v6e/v7x MXU pass on the N axis and halves step overhead;
        # 128 for small P (and the right size on v5e's 128-wide MXU).
        probe_tile = 128 if P <= 128 else 256
    tp = int(probe_tile)
    num_tiles = -(-P // tp)
    p_pad = num_tiles * tp

    # Probes ride the lane axis: coords as (1, P_pad); padding uses index 0
    # (always a valid coordinate); padded outputs are dropped at the end.
    px_row = jnp.zeros((1, p_pad), jnp.int32).at[0, :P].set(px)
    py_row = jnp.zeros((1, p_pad), jnp.int32).at[0, :P].set(py)

    itemsize = jnp.dtype(field.dtype).itemsize
    field_bytes = int(B * H * W * itemsize)
    out_bytes = int(B * p_pad * itemsize)
    cost = pl.CostEstimate(
        # One-hot gather matmuls; x3 for Precision.HIGHEST multi-pass f32.
        flops=3 * 2 * B * H * W * p_pad,
        transcendentals=0,
        bytes_accessed=field_bytes + out_bytes + 2 * p_pad * 4,
    )

    # VMEM budget: single-buffered resident field + per-tile intermediates
    # (col_sel (W,TP), row_mask/rows/picked (H,TP) f32, small coord/out tiles),
    # capped below the physical per-core VMEM (64 MiB on v7x).
    inter_bytes = tp * (W * itemsize + 3 * H * 4) + 4 * B * tp * itemsize + 8 * tp * 4
    needed = field_bytes + inter_bytes + (4 << 20)
    try:
        vmem_cap = int(pltpu.get_tpu_info().vmem_capacity_bytes)
    except Exception:
        vmem_cap = 64 << 20  # conservative: v7x per-TensorCore VMEM
    vmem_limit = int(min(vmem_cap - (4 << 20), max(32 << 20, needed)))

    # Megacore sharding only pays off when there are enough probe tiles to
    # amortize each core DMA-ing its own copy of the resident field.
    semantics = ("parallel",) if num_tiles >= 4 else ("arbitrary",)

    out = pl.pallas_call(
        _wave_probe_kernel,
        out_shape=jax.ShapeDtypeStruct((B, p_pad), field.dtype),
        grid=(num_tiles,),
        in_specs=[
            pl.BlockSpec((1, tp), lambda t: (0, t)),        # px tile (lanes)
            pl.BlockSpec((1, tp), lambda t: (0, t)),        # py tile (lanes)
            # Resident wavefield: constant block index; single-buffered so it
            # charges 1x field_bytes of VMEM instead of the default 2x.
            pl.BlockSpec((B, H, W), lambda t: (0, 0, 0),
                         pipeline_mode=pl.Buffered(1)),
        ],
        out_specs=pl.BlockSpec((B, tp), lambda t: (0, t)),  # lane-dense writeback
        compiler_params=pltpu.CompilerParams(
            dimension_semantics=semantics,
            vmem_limit_bytes=vmem_limit,
        ),
        cost_estimate=cost,
    )(px_row, py_row, field)

    # Already (B, P_pad); just drop probe padding.
    return out[:, :P]


if __name__ == "__main__":
    key = jax.random.PRNGKey(0)
    B, H, W, P = 2, 16, 16, 10   # P not a multiple of the tile -> exercises padding

    field = jax.random.normal(key, (B, H, W), dtype=jnp.float32)
    # Deterministic probe locations (the registered buffers in PyTorch).
    px = jnp.array([0, 3, 5, 7, 9, 11, 13, 15, 2, 8], dtype=jnp.int32)
    py = jnp.array([1, 2, 4, 6, 8, 10, 12, 14, 15, 0], dtype=jnp.int32)

    out = wave_probe(field, px, py)
    out = jax.block_until_ready(out)

    # Reference: exact PyTorch advanced-indexing semantics x[:, px, py].
    ref = field[:, px, py]
    assert out.shape == (B, P), out.shape
    assert jnp.allclose(out, ref, atol=1e-6, rtol=1e-6), "mismatch vs reference gather"

    print("KERNEL_OK")
</pallas_src>

<mosaic_0001>
module attributes {stable_mosaic.version = 11 : i64} {
  func.func @_wave_probe_kernel(%arg0: i32, %arg1: memref<1x128xi32, #tpu.memory_space<vmem>>, %arg2: memref<1x128xi32, #tpu.memory_space<vmem>>, %arg3: memref<2x16x16xf32, #tpu.memory_space<vmem>>, %arg4: memref<2x128xf32, #tpu.memory_space<vmem>>) attributes {dimension_semantics = [#tpu.dimension_semantics<arbitrary>], iteration_bounds = array<i64: 1>, scalar_prefetch = 0 : i64, scratch_operands = 0 : i64, tpu.core_type = #tpu.core_type<tc>, window_params = [{transform_indices = @transform_0, window_bounds = array<i64: 1, 128>}, {transform_indices = @transform_1, window_bounds = array<i64: 1, 128>}, {pipeline_mode = #tpu.pipeline_mode<synchronous>, transform_indices = @transform_2, window_bounds = array<i64: 2, 16, 16>}, {transform_indices = @transform_3, window_bounds = array<i64: 2, 128>}]} {
    %c0 = arith.constant 0 : index
    %c0_0 = arith.constant 0 : index
    %0 = vector.load %arg1[%c0, %c0_0] : memref<1x128xi32, #tpu.memory_space<vmem>>, vector<1x128xi32>
    %c0_1 = arith.constant 0 : index
    %c0_2 = arith.constant 0 : index
    %1 = vector.load %arg2[%c0_1, %c0_2] : memref<1x128xi32, #tpu.memory_space<vmem>>, vector<1x128xi32>
    %2 = tpu.iota {dimensions = array<i32: 0>} : vector<16x128xi32>
    %3 = vector.broadcast %1 : vector<1x128xi32> to vector<16x128xi32>
    %4 = arith.cmpi eq, %2, %3 : vector<16x128xi32>
    %5 = arith.extui %4 : vector<16x128xi1> to vector<16x128xi32>
    %6 = arith.sitofp %5 : vector<16x128xi32> to vector<16x128xf32>
    %7 = tpu.iota {dimensions = array<i32: 0>} : vector<16x128xi32>
    %8 = vector.broadcast %0 : vector<1x128xi32> to vector<16x128xi32>
    %9 = arith.cmpi eq, %7, %8 : vector<16x128xi32>
    %c0_3 = arith.constant 0 : index
    %c0_4 = arith.constant 0 : index
    %c0_5 = arith.constant 0 : index
    %10 = vector.load %arg3[%c0_3, %c0_4, %c0_5] : memref<2x16x16xf32, #tpu.memory_space<vmem>>, vector<1x16x16xf32>
    %11 = vector.shape_cast %10 : vector<1x16x16xf32> to vector<16x16xf32>
    %cst = arith.constant dense<0.000000e+00> : vector<16x128xf32>
    %12 = tpu.matmul %11, %6, %cst {dimension_numbers = #tpu.dot_dimension_numbers<[1], [0], [0], [1], [0, 0, 1, 1], [], []>, precision = #tpu.contract_precision<fp32>} : vector<16x16xf32>, vector<16x128xf32>, vector<16x128xf32> -> vector<16x128xf32>
    %cst_6 = arith.constant 0.000000e+00 : f32
    %13 = vector.broadcast %cst_6 : f32 to vector<16x128xf32>
    %14 = arith.select %9, %12, %13 : vector<16x128xi1>, vector<16x128xf32>
    %cst_7 = arith.constant dense<0.000000e+00> : vector<128xf32>
    %15 = vector.multi_reduction <add>, %14, %cst_7 [0] : vector<16x128xf32> to vector<128xf32>
    %16 = vector.shape_cast %15 : vector<128xf32> to vector<1x128xf32>
    %c1 = arith.constant 1 : index
    %c0_8 = arith.constant 0 : index
    %c0_9 = arith.constant 0 : index
    %17 = vector.load %arg3[%c1, %c0_8, %c0_9] : memref<2x16x16xf32, #tpu.memory_space<vmem>>, vector<1x16x16xf32>
    %18 = vector.shape_cast %17 : vector<1x16x16xf32> to vector<16x16xf32>
    %cst_10 = arith.constant dense<0.000000e+00> : vector<16x128xf32>
    %19 = tpu.matmul %18, %6, %cst_10 {dimension_numbers = #tpu.dot_dimension_numbers<[1], [0], [0], [1], [0, 0, 1, 1], [], []>, precision = #tpu.contract_precision<fp32>} : vector<16x16xf32>, vector<16x128xf32>, vector<16x128xf32> -> vector<16x128xf32>
    %cst_11 = arith.constant 0.000000e+00 : f32
    %20 = vector.broadcast %cst_11 : f32 to vector<16x128xf32>
    %21 = arith.select %9, %19, %20 : vector<16x128xi1>, vector<16x128xf32>
    %cst_12 = arith.constant dense<0.000000e+00> : vector<128xf32>
    %22 = vector.multi_reduction <add>, %21, %cst_12 [0] : vector<16x128xf32> to vector<128xf32>
    %23 = vector.shape_cast %22 : vector<128xf32> to vector<1x128xf32>
    %24 = tpu.concatenate %16, %23 in 0 : vector<1x128xf32>, vector<1x128xf32> -> vector<2x128xf32>
    %c0_13 = arith.constant 0 : index
    %c0_14 = arith.constant 0 : index
    %25 = vector.load %arg4[%c0_13, %c0_14] : memref<2x128xf32, #tpu.memory_space<vmem>>, vector<2x128xf32>
    tpu.vector_store %arg4[%c0_13, %c0_14], %24 {strides = array<i32>} : memref<2x128xf32, #tpu.memory_space<vmem>>, vector<2x128xf32>,
    return
  }
  func.func @transform_0(%arg0: i32) -> (i32, i32) {
    %c0_i32 = arith.constant 0 : i32
    %c0_i32_0 = arith.constant 0 : i32
    return %c0_i32, %arg0 : i32, i32
  }
  func.func @transform_1(%arg0: i32) -> (i32, i32) {
    %c0_i32 = arith.constant 0 : i32
    %c0_i32_0 = arith.constant 0 : i32
    return %c0_i32, %arg0 : i32, i32
  }
  func.func @transform_2(%arg0: i32) -> (i32, i32, i32) {
    %c0_i32 = arith.constant 0 : i32
    %c0_i32_0 = arith.constant 0 : i32
    %c0_i32_1 = arith.constant 0 : i32
    %c0_i32_2 = arith.constant 0 : i32
    return %c0_i32, %c0_i32_0, %c0_i32_1 : i32, i32, i32
  }
  func.func @transform_3(%arg0: i32) -> (i32, i32) {
    %c0_i32 = arith.constant 0 : i32
    %c0_i32_0 = arith.constant 0 : i32
    return %c0_i32, %arg0 : i32, i32
  }
}

</mosaic_0001>

<llo_original>
// kernel: tpu_custom_call.1
$region0: #{tpu_custom_call.1}
  #allocation0 [shape = 'u32[]', space=smem, size = 0x4, offset = 0x4, fixed_abs, tag = 'smem constant byte address 0x4 - core index']
  #allocation1 [shape = 'u32[144,128]{1,0:T(1,128)}', space=vmem, size = 0x12000, scoped, tag = 'internal scratch']
  %s0 = inlined_call_operand.hbm [shape: s32[1,128], index: 0, kind: input, shape index: {}]
  %s1 = inlined_call_operand.vmem [shape: s32[1,128], index: 1, kind: input, shape index: {}]
  %s2 = inlined_call_operand.hbm [shape: f32[2,16,16], index: 2, kind: input, shape index: {}]
  %s3 = inlined_call_operand.hbm [shape: f32[2,128], index: 3, kind: output, shape index: {}]
  %s4 = sld [smem:[#allocation0]]
  $region30: #{tpu_custom_call.1} parent=0
    _
  %s6 = ssub.s32 1, %s4
  %s7 = scalar_select 0, %s6, %s4
  $region1: #{tpu_custom_call.1} parent=0
    #allocation2 [shape = 'u8[512]{0}', space=vmem, size = 0x400, scoped, tag = 'input window, operand 0, single buffered']
    #allocation3 [shape = 's32[1]{0}', space=sflag, size = 0x4, scoped, tag = 'scoped memory for tpu_custom_call.1']
    #allocation4 [shape = 's32[1]{0}', space=sflag, size = 0x4, scoped, tag = 'scoped memory for tpu_custom_call.1']
    #allocation5 [shape = 'u8[16384]{0}', space=vmem, size = 0x4000, scoped, tag = 'input window, operand 2, single buffered']
    #allocation6 [shape = 's32[1]{0}', space=sflag, size = 0x4, scoped, tag = 'scoped memory for tpu_custom_call.1']
    #allocation7 [shape = 'u8[1024]{0}', space=vmem, size = 0x400, scoped, tag = 'output window, operand 0, single buffered']
    %8 = vsyncpa [#allocation3], 0
    %9 = vsyncpa [#allocation6], 0
    %10 = vsyncpa [#allocation4], 0
    // Predicated region
    $region2: #{tpu_custom_call.1} parent=1 // pred_check
      _
    $region3: #{tpu_custom_call.1} parent=1 // pred_check_branch
      %12 = sbr.rel (0) target = $region5
    $region4: #{tpu_custom_call.1} parent=1 // pred_region
      %s14 = ssub.s32 16, 16
      %15 = vsyncadd [#allocation3], %s14
      %s17 = sshll.u32 [#allocation2], 4
      %s18 = int_to_ptr.vmem [resolvable:$true] %s17
      %20 = dma.hbm_to_vmem [thread:$0]  %s0, 16, %s18, [#allocation3]
    $region5: #{tpu_custom_call.1} parent=1 // pred_fallthru
      _
    // Predicated region
    $region6: #{tpu_custom_call.1} parent=1 // pred_check
      _
    $region7: #{tpu_custom_call.1} parent=1 // pred_check_branch
      %22 = sbr.rel (0) target = $region9
    $region8: #{tpu_custom_call.1} parent=1 // pred_region
      _
    $region9: #{tpu_custom_call.1} parent=1 // pred_fallthru
      _
    // Predicated region
    $region10: #{tpu_custom_call.1} parent=1 // pred_check
      _
    $region11: #{tpu_custom_call.1} parent=1 // pred_check_branch
      %24 = sbr.rel (0) target = $region13
    $region12: #{tpu_custom_call.1} parent=1 // pred_region
      %s26 = ssub.s32 512, 512
      %27 = vsyncadd [#allocation6], %s26
      %s28 = sshll.u32 [#allocation5], 4
      %s29 = int_to_ptr.vmem [resolvable:$true] %s28
      %34 = dma.hbm_to_vmem [thread:$0]  %s2, 512, %s29, [#allocation6], 128, 128, 8
    $region13: #{tpu_custom_call.1} parent=1 // pred_fallthru
      _
    // Predicated region
    $region14: #{tpu_custom_call.1} parent=1 // pred_check
      _
    $region15: #{tpu_custom_call.1} parent=1 // pred_check_branch
      %36 = sbr.rel (0) target = $region17
    $region16: #{tpu_custom_call.1} parent=1 // pred_region
      %37 = dma.done [#allocation3], 16
    $region17: #{tpu_custom_call.1} parent=1 // pred_fallthru
      _
    // Predicated region
    $region18: #{tpu_custom_call.1} parent=1 // pred_check
      _
    $region19: #{tpu_custom_call.1} parent=1 // pred_check_branch
      %39 = sbr.rel (0) target = $region21
    $region20: #{tpu_custom_call.1} parent=1 // pred_region
      %40 = dma.done [#allocation6], 512
    $region21: #{tpu_custom_call.1} parent=1 // pred_fallthru
      _
    %v41 = vld [vmem:[#allocation2] sm:$0x1]
    %v42 = vld [vmem:[%s1] sm:$0x1]
    %v43 = vlaneseq
    %v44 = vshrl.u32 %v43, 7
    %v45 = vadd.s32 %v44, 8
    %v46 = vlaneseq
    %v47 = vshrl.u32 %v46, 7
    %v48 = vsub.s32 0, %v47
    %v49 = vrot.slane %v42, %v48
    %vm50 = vcmp.eq.s32.totalorder %v44, %v49
    %vm51 = vcmp.eq.s32.totalorder %v45, %v49
    %v52 = vsel %vm50, 1, 0
    %v53 = vsel %vm51, 1, 0
    %v54 = vcvt.s32.f32 %v52
    %v55 = vcvt.s32.f32 %v53
    %v56 = vlaneseq
    %v57 = vshrl.u32 %v56, 7
    %v58 = vsub.s32 0, %v57
    %v59 = vrot.slane %v41, %v58
    %vm60 = vcmp.eq.s32.totalorder %v44, %v59
    %vm61 = vcmp.eq.s32.totalorder %v45, %v59
    %v62 = vld [vmem:[#allocation5] sm:$0xff]
    %v63 = vld [vmem:[#allocation5 + $0x8] sm:$0xff]
    %vm64 = vcmask 130048
    %v66 = vsel %vm64, %v62, 0
    %v69 = vsel %vm64, %v63, 0
    %71 = vmatprep.subr.mxu0 0.0
    %v72 = vand.u32 %v54, 4294901760
    %73 = vmatpush1.msra.mxu0 %v72
    %74 = vmatprep.subr.mxu0 0.0
    %v75 = vand.u32 %v55, 4294901760
    %76 = vmatpush1.msra.mxu0 %v75
    %77 = vmatprep.subr.mxu0 0.0
    %78 = vmatpush1.msra.mxu0 0.0
    %79 = vmatprep.subr.mxu0 0.0
    %80 = vmatpush1.msra.mxu0 0.0
    %81 = vmatprep.subr.mxu0 0.0
    %82 = vmatpush1.msra.mxu0 0.0
    %83 = vmatprep.subr.mxu0 0.0
    %84 = vmatpush1.msra.mxu0 0.0
    %85 = vmatprep.subr.mxu0 0.0
    %86 = vmatpush1.msra.mxu0 0.0
    %87 = vmatprep.subr.mxu0 0.0
    %88 = vmatpush1.msra.mxu0 0.0
    %89 = vmatprep.subr.mxu0 0.0
    %90 = vmatpush1.msra.mxu0 0.0
    %91 = vmatprep.subr.mxu0 0.0
    %92 = vmatpush1.msra.mxu0 0.0
    %93 = vmatprep.subr.mxu0 0.0
    %94 = vmatpush1.msra.mxu0 0.0
    %95 = vmatprep.subr.mxu0 0.0
    %96 = vmatpush1.msra.mxu0 0.0
    %97 = vmatprep.subr.mxu0 0.0
    %98 = vmatpush1.msra.mxu0 0.0
    %99 = vmatprep.subr.mxu0 0.0
    %100 = vmatpush1.msra.mxu0 0.0
    %101 = vmatprep.subr.mxu0 0.0
    %102 = vmatpush1.msra.mxu0 0.0
    %103 = vmatprep.subr.mxu0 0.0
    %104 = vmatpush1.msra.mxu0 0.0
    %105 = vmatprep.subr.mxu0 0.0
    %106 = vmatpush1.msra.mxu0 0.0
    %107 = vmatprep.subr.mxu0 0.0
    %108 = vmatpush1.msra.mxu0 0.0
    %109 = vmatprep.subr.mxu0 0.0
    %110 = vmatpush1.msra.mxu0 0.0
    %111 = vmatprep.subr.mxu0 0.0
    %112 = vmatpush1.msra.mxu0 0.0
    %113 = vmatprep.subr.mxu0 0.0
    %114 = vmatpush1.msra.mxu0 0.0
    %115 = vmatprep.subr.mxu0 0.0
    %116 = vmatpush1.msra.mxu0 0.0
    %117 = vmatprep.subr.mxu0 0.0
    %118 = vmatpush1.msra.mxu0 0.0
    %119 = vmatprep.subr.mxu0 0.0
    %120 = vmatpush1.msra.mxu0 0.0
    %121 = vmatprep.subr.mxu0 0.0
    %122 = vmatpush1.msra.mxu0 0.0
    %123 = vmatprep.subr.mxu0 0.0
    %124 = vmatpush1.msra.mxu0 0.0
    %125 = vmatprep.subr.mxu0 0.0
    %126 = vmatpush1.msra.mxu0 0.0
    %127 = vmatprep.subr.mxu0 0.0
    %128 = vmatpush1.msra.mxu0 0.0
    %129 = vmatprep.subr.mxu0 0.0
    %130 = vmatpush1.msra.mxu0 0.0
    %131 = vmatprep.subr.mxu0 0.0
    %132 = vmatpush1.msra.mxu0 0.0
    %133 = vmatprep.subr.mxu0 0.0
    %134 = vmatpush1.msra.mxu0 0.0
    %135 = vmatprep.subr.mxu0 0.0
    %136 = vmatpush1.msra.mxu0 0.0
    %137 = vmatprep.mubr.f32.mxu0 0.0
    %v138 = vand.u32 %v66, 4294901760
    %v139 = vsub.f32 %v66, %v138
    %v140 = vand.u32 %v139, 4294901760
    %v141 = vsub.f32 %v139, %v140
    %v142 = vand.u32 %v141, 4294901760
    %143 = vmatmul.mubr.f32.gmra.mrb[0].mxu0 %v142
    %v144 = vpop.f32.mrb[0].mxu0
    %v145 = vadd.f32 0.0, %v144
    %v146 = vpop.f32.mrb[0].mxu0
    %147 = vmatprep.mubr.f32.mxu0 0.0
    %v148 = vand.u32 %v69, 4294901760
    %v149 = vsub.f32 %v69, %v148
    %v150 = vand.u32 %v149, 4294901760
    %v151 = vsub.f32 %v149, %v150
    %v152 = vand.u32 %v151, 4294901760
    %153 = vmatmul.mubr.f32.gmra.mrb[0].mxu0 %v152
    %v154 = vpop.f32.mrb[0].mxu0
    %v155 = vadd.f32 0.0, %v154
    %v156 = vpop.f32.mrb[0].mxu0
    %157 = vdwg.mxu0
    %158 = vmatprep.subr.mxu0 0.0
    %v159 = vand.u32 %v54, 4294901760
    %v160 = vsub.f32 %v54, %v159
    %v161 = vand.u32 %v160, 4294901760
    %v162 = vsub.f32 %v160, %v161
    %v163 = vand.u32 %v162, 4294901760
    %164 = vmatpush1.msra.mxu0 %v163
    %165 = vmatprep.subr.mxu0 0.0
    %v166 = vand.u32 %v55, 4294901760
    %v167 = vsub.f32 %v55, %v166
    %v168 = vand.u32 %v167, 4294901760
    %v169 = vsub.f32 %v167, %v168
    %v170 = vand.u32 %v169, 4294901760
    %171 = vmatpush1.msra.mxu0 %v170
    %172 = vmatprep.subr.mxu0 0.0
    %173 = vmatpush1.msra.mxu0 0.0
    %174 = vmatprep.subr.mxu0 0.0
    %175 = vmatpush1.msra.mxu0 0.0
    %176 = vmatprep.subr.mxu0 0.0
    %177 = vmatpush1.msra.mxu0 0.0
    %178 = vmatprep.subr.mxu0 0.0
    %179 = vmatpush1.msra.mxu0 0.0
    %180 = vmatprep.subr.mxu0 0.0
    %181 = vmatpush1.msra.mxu0 0.0
    %182 = vmatprep.subr.mxu0 0.0
    %183 = vmatpush1.msra.mxu0 0.0
    %184 = vmatprep.subr.mxu0 0.0
    %185 = vmatpush1.msra.mxu0 0.0
    %186 = vmatprep.subr.mxu0 0.0
    %187 = vmatpush1.msra.mxu0 0.0
    %188 = vmatprep.subr.mxu0 0.0
    %189 = vmatpush1.msra.mxu0 0.0
    %190 = vmatprep.subr.mxu0 0.0
    %191 = vmatpush1.msra.mxu0 0.0
    %192 = vmatprep.subr.mxu0 0.0
    %193 = vmatpush1.msra.mxu0 0.0
    %194 = vmatprep.subr.mxu0 0.0
    %195 = vmatpush1.msra.mxu0 0.0
    %196 = vmatprep.subr.mxu0 0.0
    %197 = vmatpush1.msra.mxu0 0.0
    %198 = vmatprep.subr.mxu0 0.0
    %199 = vmatpush1.msra.mxu0 0.0
    %200 = vmatprep.subr.mxu0 0.0
    %201 = vmatpush1.msra.mxu0 0.0
    %202 = vmatprep.subr.mxu0 0.0
    %203 = vmatpush1.msra.mxu0 0.0
    %204 = vmatprep.subr.mxu0 0.0
    %205 = vmatpush1.msra.mxu0 0.0
    %206 = vmatprep.subr.mxu0 0.0
    %207 = vmatpush1.msra.mxu0 0.0
    %208 = vmatprep.subr.mxu0 0.0
    %209 = vmatpush1.msra.mxu0 0.0
    %210 = vmatprep.subr.mxu0 0.0
    %211 = vmatpush1.msra.mxu0 0.0
    %212 = vmatprep.subr.mxu0 0.0
    %213 = vmatpush1.msra.mxu0 0.0
    %214 = vmatprep.subr.mxu0 0.0
    %215 = vmatpush1.msra.mxu0 0.0
    %216 = vmatprep.subr.mxu0 0.0
    %217 = vmatpush1.msra.mxu0 0.0
    %218 = vmatprep.subr.mxu0 0.0
    %219 = vmatpush1.msra.mxu0 0.0
    %220 = vmatprep.subr.mxu0 0.0
    %221 = vmatpush1.msra.mxu0 0.0
    %222 = vmatprep.subr.mxu0 0.0
    %223 = vmatpush1.msra.mxu0 0.0
    %224 = vmatprep.subr.mxu0 0.0
    %225 = vmatpush1.msra.mxu0 0.0
    %226 = vmatprep.subr.mxu0 0.0
    %227 = vmatpush1.msra.mxu0 0.0
    %228 = vmatprep.subr.mxu0 0.0
    %229 = vmatpush1.msra.mxu0 0.0
    %230 = vmatprep.subr.mxu0 0.0
    %231 = vmatpush1.msra.mxu0 0.0
    %232 = vmatprep.mubr.f32.mxu0 0.0
    %v233 = vand.u32 %v66, 4294901760
    %234 = vmatmul.mubr.f32.gmra.mrb[0].mxu0 %v233
    %v235 = vpop.f32.mrb[0].mxu0
    %v236 = vadd.f32 %v145, %v235
    %v237 = vpop.f32.mrb[0].mxu0
    %238 = vmatprep.mubr.f32.mxu0 0.0
    %v239 = vand.u32 %v69, 4294901760
    %240 = vmatmul.mubr.f32.gmra.mrb[0].mxu0 %v239
    %v241 = vpop.f32.mrb[0].mxu0
    %v242 = vadd.f32 %v155, %v241
    %v243 = vpop.f32.mrb[0].mxu0
    %244 = vdwg.mxu0
    %245 = vmatprep.subr.mxu0 0.0
    %v246 = vand.u32 %v54, 4294901760
    %v247 = vsub.f32 %v54, %v246
    %248 = vmatpush1.msra.mxu0 %v247
    %249 = vmatprep.subr.mxu0 0.0
    %v250 = vand.u32 %v55, 4294901760
    %v251 = vsub.f32 %v55, %v250
    %252 = vmatpush1.msra.mxu0 %v251
    %253 = vmatprep.subr.mxu0 0.0
    %254 = vmatpush1.msra.mxu0 0.0
    %255 = vmatprep.subr.mxu0 0.0
    %256 = vmatpush1.msra.mxu0 0.0
    %257 = vmatprep.subr.mxu0 0.0
    %258 = vmatpush1.msra.mxu0 0.0
    %259 = vmatprep.subr.mxu0 0.0
    %260 = vmatpush1.msra.mxu0 0.0
    %261 = vmatprep.subr.mxu0 0.0
    %262 = vmatpush1.msra.mxu0 0.0
    %263 = vmatprep.subr.mxu0 0.0
    %264 = vmatpush1.msra.mxu0 0.0
    %265 = vmatprep.subr.mxu0 0.0
    %266 = vmatpush1.msra.mxu0 0.0
    %267 = vmatprep.subr.mxu0 0.0
    %268 = vmatpush1.msra.mxu0 0.0
    %269 = vmatprep.subr.mxu0 0.0
    %270 = vmatpush1.msra.mxu0 0.0
    %271 = vmatprep.subr.mxu0 0.0
    %272 = vmatpush1.msra.mxu0 0.0
    %273 = vmatprep.subr.mxu0 0.0
    %274 = vmatpush1.msra.mxu0 0.0
    %275 = vmatprep.subr.mxu0 0.0
    %276 = vmatpush1.msra.mxu0 0.0
    %277 = vmatprep.subr.mxu0 0.0
    %278 = vmatpush1.msra.mxu0 0.0
    %279 = vmatprep.subr.mxu0 0.0
    %280 = vmatpush1.msra.mxu0 0.0
    %281 = vmatprep.subr.mxu0 0.0
    %282 = vmatpush1.msra.mxu0 0.0
    %283 = vmatprep.subr.mxu0 0.0
    %284 = vmatpush1.msra.mxu0 0.0
    %285 = vmatprep.subr.mxu0 0.0
    %286 = vmatpush1.msra.mxu0 0.0
    %287 = vmatprep.subr.mxu0 0.0
    %288 = vmatpush1.msra.mxu0 0.0
    %289 = vmatprep.subr.mxu0 0.0
    %290 = vmatpush1.msra.mxu0 0.0
    %291 = vmatprep.subr.mxu0 0.0
    %292 = vmatpush1.msra.mxu0 0.0
    %293 = vmatprep.subr.mxu0 0.0
    %294 = vmatpush1.msra.mxu0 0.0
    %295 = vmatprep.subr.mxu0 0.0
    %296 = vmatpush1.msra.mxu0 0.0
    %297 = vmatprep.subr.mxu0 0.0
    %298 = vmatpush1.msra.mxu0 0.0
    %299 = vmatprep.subr.mxu0 0.0
    %300 = vmatpush1.msra.mxu0 0.0
    %301 = vmatprep.subr.mxu0 0.0
    %302 = vmatpush1.msra.mxu0 0.0
    %303 = vmatprep.subr.mxu0 0.0
    %304 = vmatpush1.msra.mxu0 0.0
    %305 = vmatprep.subr.mxu0 0.0
    %306 = vmatpush1.msra.mxu0 0.0
    %307 = vmatprep.subr.mxu0 0.0
    %308 = vmatpush1.msra.mxu0 0.0
    %309 = vmatprep.subr.mxu0 0.0
    %310 = vmatpush1.msra.mxu0 0.0
    %311 = vmatprep.subr.mxu0 0.0
    %312 = vmatpush1.msra.mxu0 0.0
    %313 = vmatprep.mubr.f32.mxu0 0.0
    %v314 = vand.u32 %v66, 4294901760
    %v315 = vsub.f32 %v66, %v314
    %316 = vmatmul.mubr.f32.gmra.mrb[0].mxu0 %v315
    %v317 = vpop.f32.mrb[0].mxu0
    %v318 = vadd.f32 %v236, %v317
    %v319 = vpop.f32.mrb[0].mxu0
    %320 = vmatprep.mubr.f32.mxu0 0.0
    %v321 = vand.u32 %v69, 4294901760
    %v322 = vsub.f32 %v69, %v321
    %323 = vmatmul.mubr.f32.gmra.mrb[0].mxu0 %v322
    %v324 = vpop.f32.mrb[0].mxu0
    %v325 = vadd.f32 %v242, %v324
    %v326 = vpop.f32.mrb[0].mxu0
    %327 = vdwg.mxu0
    %328 = vmatprep.subr.mxu0 0.0
    %v329 = vand.u32 %v54, 4294901760
    %330 = vmatpush1.msra.mxu0 %v329
    %331 = vmatprep.subr.mxu0 0.0
    %v332 = vand.u32 %v55, 4294901760
    %333 = vmatpush1.msra.mxu0 %v332
    %334 = vmatprep.subr.mxu0 0.0
    %335 = vmatpush1.msra.mxu0 0.0
    %336 = vmatprep.subr.mxu0 0.0
    %337 = vmatpush1.msra.mxu0 0.0
    %338 = vmatprep.subr.mxu0 0.0
    %339 = vmatpush1.msra.mxu0 0.0
    %340 = vmatprep.subr.mxu0 0.0
    %341 = vmatpush1.msra.mxu0 0.0
    %342 = vmatprep.subr.mxu0 0.0
    %343 = vmatpush1.msra.mxu0 0.0
    %344 = vmatprep.subr.mxu0 0.0
    %345 = vmatpush1.msra.mxu0 0.0
    %346 = vmatprep.subr.mxu0 0.0
    %347 = vmatpush1.msra.mxu0 0.0
    %348 = vmatprep.subr.mxu0 0.0
    %349 = vmatpush1.msra.mxu0 0.0
    %350 = vmatprep.subr.mxu0 0.0
    %351 = vmatpush1.msra.mxu0 0.0
    %352 = vmatprep.subr.mxu0 0.0
    %353 = vmatpush1.msra.mxu0 0.0
    %354 = vmatprep.subr.mxu0 0.0
    %355 = vmatpush1.msra.mxu0 0.0
    %356 = vmatprep.subr.mxu0 0.0
    %357 = vmatpush1.msra.mxu0 0.0
    %358 = vmatprep.subr.mxu0 0.0
    %359 = vmatpush1.msra.mxu0 0.0
    %360 = vmatprep.subr.mxu0 0.0
    %361 = vmatpush1.msra.mxu0 0.0
    %362 = vmatprep.subr.mxu0 0.0
    %363 = vmatpush1.msra.mxu0 0.0
    %364 = vmatprep.subr.mxu0 0.0
    %365 = vmatpush1.msra.mxu0 0.0
    %366 = vmatprep.subr.mxu0 0.0
    %367 = vmatpush1.msra.mxu0 0.0
    %368 = vmatprep.subr.mxu0 0.0
    %369 = vmatpush1.msra.mxu0 0.0
    %370 = vmatprep.subr.mxu0 0.0
    %371 = vmatpush1.msra.mxu0 0.0
    %372 = vmatprep.subr.mxu0 0.0
    %373 = vmatpush1.msra.mxu0 0.0
    %374 = vmatprep.subr.mxu0 0.0
    %375 = vmatpush1.msra.mxu0 0.0
    %376 = vmatprep.subr.mxu0 0.0
    %377 = vmatpush1.msra.mxu0 0.0
    %378 = vmatprep.subr.mxu0 0.0
    %379 = vmatpush1.msra.mxu0 0.0
    %380 = vmatprep.subr.mxu0 0.0
    %381 = vmatpush1.msra.mxu0 0.0
    %382 = vmatprep.subr.mxu0 0.0
    %383 = vmatpush1.msra.mxu0 0.0
    %384 = vmatprep.subr.mxu0 0.0
    %385 = vmatpush1.msra.mxu0 0.0
    %386 = vmatprep.subr.mxu0 0.0
    %387 = vmatpush1.msra.mxu0 0.0
    %388 = vmatprep.subr.mxu0 0.0
    %389 = vmatpush1.msra.mxu0 0.0
    %390 = vmatprep.subr.mxu0 0.0
    %391 = vmatpush1.msra.mxu0 0.0
    %392 = vmatprep.subr.mxu0 0.0
    %393 = vmatpush1.msra.mxu0 0.0
    %394 = vmatprep.mubr.f32.mxu0 0.0
    %v395 = vand.u32 %v66, 4294901760
    %v396 = vsub.f32 %v66, %v395
    %v397 = vand.u32 %v396, 4294901760
    %398 = vmatmul.mubr.f32.gmra.mrb[0].mxu0 %v397
    %v399 = vpop.f32.mrb[0].mxu0
    %v400 = vadd.f32 %v318, %v399
    %v401 = vpop.f32.mrb[0].mxu0
    %402 = vmatprep.mubr.f32.mxu0 0.0
    %v403 = vand.u32 %v69, 4294901760
    %v404 = vsub.f32 %v69, %v403
    %v405 = vand.u32 %v404, 4294901760
    %406 = vmatmul.mubr.f32.gmra.mrb[0].mxu0 %v405
    %v407 = vpop.f32.mrb[0].mxu0
    %v408 = vadd.f32 %v325, %v407
    %v409 = vpop.f32.mrb[0].mxu0
    %410 = vdwg.mxu0
    %411 = vmatprep.subr.mxu0 0.0
    %v412 = vand.u32 %v54, 4294901760
    %v413 = vsub.f32 %v54, %v412
    %v414 = vand.u32 %v413, 4294901760
    %415 = vmatpush1.msra.mxu0 %v414
    %416 = vmatprep.subr.mxu0 0.0
    %v417 = vand.u32 %v55, 4294901760
    %v418 = vsub.f32 %v55, %v417
    %v419 = vand.u32 %v418, 4294901760
    %420 = vmatpush1.msra.mxu0 %v419
    %421 = vmatprep.subr.mxu0 0.0
    %422 = vmatpush1.msra.mxu0 0.0
    %423 = vmatprep.subr.mxu0 0.0
    %424 = vmatpush1.msra.mxu0 0.0
    %425 = vmatprep.subr.mxu0 0.0
    %426 = vmatpush1.msra.mxu0 0.0
    %427 = vmatprep.subr.mxu0 0.0
    %428 = vmatpush1.msra.mxu0 0.0
    %429 = vmatprep.subr.mxu0 0.0
    %430 = vmatpush1.msra.mxu0 0.0
    %431 = vmatprep.subr.mxu0 0.0
    %432 = vmatpush1.msra.mxu0 0.0
    %433 = vmatprep.subr.mxu0 0.0
    %434 = vmatpush1.msra.mxu0 0.0
    %435 = vmatprep.subr.mxu0 0.0
    %436 = vmatpush1.msra.mxu0 0.0
    %437 = vmatprep.subr.mxu0 0.0
    %438 = vmatpush1.msra.mxu0 0.0
    %439 = vmatprep.subr.mxu0 0.0
    %440 = vmatpush1.msra.mxu0 0.0
    %441 = vmatprep.subr.mxu0 0.0
    %442 = vmatpush1.msra.mxu0 0.0
    %443 = vmatprep.subr.mxu0 0.0
    %444 = vmatpush1.msra.mxu0 0.0
    %445 = vmatprep.subr.mxu0 0.0
    %446 = vmatpush1.msra.mxu0 0.0
    %447 = vmatprep.subr.mxu0 0.0
    %448 = vmatpush1.msra.mxu0 0.0
    %449 = vmatprep.subr.mxu0 0.0
    %450 = vmatpush1.msra.mxu0 0.0
    %451 = vmatprep.subr.mxu0 0.0
    %452 = vmatpush1.msra.mxu0 0.0
    %453 = vmatprep.subr.mxu0 0.0
    %454 = vmatpush1.msra.mxu0 0.0
    %455 = vmatprep.subr.mxu0 0.0
    %456 = vmatpush1.msra.mxu0 0.0
    %457 = vmatprep.subr.mxu0 0.0
    %458 = vmatpush1.msra.mxu0 0.0
    %459 = vmatprep.subr.mxu0 0.0
    %460 = vmatpush1.msra.mxu0 0.0
    %461 = vmatprep.subr.mxu0 0.0
    %462 = vmatpush1.msra.mxu0 0.0
    %463 = vmatprep.subr.mxu0 0.0
    %464 = vmatpush1.msra.mxu0 0.0
    %465 = vmatprep.subr.mxu0 0.0
    %466 = vmatpush1.msra.mxu0 0.0
    %467 = vmatprep.subr.mxu0 0.0
    %468 = vmatpush1.msra.mxu0 0.0
    %469 = vmatprep.subr.mxu0 0.0
    %470 = vmatpush1.msra.mxu0 0.0
    %471 = vmatprep.subr.mxu0 0.0
    %472 = vmatpush1.msra.mxu0 0.0
    %473 = vmatprep.subr.mxu0 0.0
    %474 = vmatpush1.msra.mxu0 0.0
    %475 = vmatprep.subr.mxu0 0.0
    %476 = vmatpush1.msra.mxu0 0.0
    %477 = vmatprep.subr.mxu0 0.0
    %478 = vmatpush1.msra.mxu0 0.0
    %479 = vmatprep.subr.mxu0 0.0
    %480 = vmatpush1.msra.mxu0 0.0
    %481 = vmatprep.mubr.f32.mxu0 0.0
    %v482 = vand.u32 %v66, 4294901760
    %483 = vmatmul.mubr.f32.gmra.mrb[0].mxu0 %v482
    %v484 = vpop.f32.mrb[0].mxu0
    %v485 = vadd.f32 %v400, %v484
    %v486 = vpop.f32.mrb[0].mxu0
    %487 = vmatprep.mubr.f32.mxu0 0.0
    %v488 = vand.u32 %v69, 4294901760
    %489 = vmatmul.mubr.f32.gmra.mrb[0].mxu0 %v488
    %v490 = vpop.f32.mrb[0].mxu0
    %v491 = vadd.f32 %v408, %v490
    %v492 = vpop.f32.mrb[0].mxu0
    %493 = vdwg.mxu0
    %494 = vmatprep.subr.mxu0 0.0
    %v495 = vand.u32 %v54, 4294901760
    %496 = vmatpush1.msra.mxu0 %v495
    %497 = vmatprep.subr.mxu0 0.0
    %v498 = vand.u32 %v55, 4294901760
    %499 = vmatpush1.msra.mxu0 %v498
    %500 = vmatprep.subr.mxu0 0.0
    %501 = vmatpush1.msra.mxu0 0.0
    %502 = vmatprep.subr.mxu0 0.0
    %503 = vmatpush1.msra.mxu0 0.0
    %504 = vmatprep.subr.mxu0 0.0
    %505 = vmatpush1.msra.mxu0 0.0
    %506 = vmatprep.subr.mxu0 0.0
    %507 = vmatpush1.msra.mxu0 0.0
    %508 = vmatprep.subr.mxu0 0.0
    %509 = vmatpush1.msra.mxu0 0.0
    %510 = vmatprep.subr.mxu0 0.0
    %511 = vmatpush1.msra.mxu0 0.0
    %512 = vmatprep.subr.mxu0 0.0
    %513 = vmatpush1.msra.mxu0 0.0
    %514 = vmatprep.subr.mxu0 0.0
    %515 = vmatpush1.msra.mxu0 0.0
    %516 = vmatprep.subr.mxu0 0.0
    %517 = vmatpush1.msra.mxu0 0.0
    %518 = vmatprep.subr.mxu0 0.0
    %519 = vmatpush1.msra.mxu0 0.0
    %520 = vmatprep.subr.mxu0 0.0
    %521 = vmatpush1.msra.mxu0 0.0
    %522 = vmatprep.subr.mxu0 0.0
    %523 = vmatpush1.msra.mxu0 0.0
    %524 = vmatprep.subr.mxu0 0.0
    %525 = vmatpush1.msra.mxu0 0.0
    %526 = vmatprep.subr.mxu0 0.0
    %527 = vmatpush1.msra.mxu0 0.0
    %528 = vmatprep.subr.mxu0 0.0
    %529 = vmatpush1.msra.mxu0 0.0
    %530 = vmatprep.subr.mxu0 0.0
    %531 = vmatpush1.msra.mxu0 0.0
    %532 = vmatprep.subr.mxu0 0.0
    %533 = vmatpush1.msra.mxu0 0.0
    %534 = vmatprep.subr.mxu0 0.0
    %535 = vmatpush1.msra.mxu0 0.0
    %536 = vmatprep.subr.mxu0 0.0
    %537 = vmatpush1.msra.mxu0 0.0
    %538 = vmatprep.subr.mxu0 0.0
    %539 = vmatpush1.msra.mxu0 0.0
    %540 = vmatprep.subr.mxu0 0.0
    %541 = vmatpush1.msra.mxu0 0.0
    %542 = vmatprep.subr.mxu0 0.0
    %543 = vmatpush1.msra.mxu0 0.0
    %544 = vmatprep.subr.mxu0 0.0
    %545 = vmatpush1.msra.mxu0 0.0
    %546 = vmatprep.subr.mxu0 0.0
    %547 = vmatpush1.msra.mxu0 0.0
    %548 = vmatprep.subr.mxu0 0.0
    %549 = vmatpush1.msra.mxu0 0.0
    %550 = vmatprep.subr.mxu0 0.0
    %551 = vmatpush1.msra.mxu0 0.0
    %552 = vmatprep.subr.mxu0 0.0
    %553 = vmatpush1.msra.mxu0 0.0
    %554 = vmatprep.subr.mxu0 0.0
    %555 = vmatpush1.msra.mxu0 0.0
    %556 = vmatprep.subr.mxu0 0.0
    %557 = vmatpush1.msra.mxu0 0.0
    %558 = vmatprep.subr.mxu0 0.0
    %559 = vmatpush1.msra.mxu0 0.0
    %560 = vmatprep.mubr.f32.mxu0 0.0
    %v561 = vand.u32 %v66, 4294901760
    %562 = vmatmul.mubr.f32.gmra.mrb[0].mxu0 %v561
    %v563 = vpop.f32.mrb[0].mxu0
    %v564 = vadd.f32 %v485, %v563
    %v565 = vpop.f32.mrb[0].mxu0
    %566 = vmatprep.mubr.f32.mxu0 0.0
    %v567 = vand.u32 %v69, 4294901760
    %568 = vmatmul.mubr.f32.gmra.mrb[0].mxu0 %v567
    %v569 = vpop.f32.mrb[0].mxu0
    %v570 = vadd.f32 %v491, %v569
    %v571 = vpop.f32.mrb[0].mxu0
    %572 = vdwg.mxu0
    %v573 = vsel %vm60, %v564, 0.0
    %v574 = vsel %vm61, %v570, 0.0
    %v575 = vadd.f32 %v573, %v574
    %v576 = vrot.slane %v575, 4
    %v577 = vadd.f32 %v575, %v576
    %v578 = vrot.slane %v577, 2
    %v579 = vadd.f32 %v577, %v578
    %v580 = vrot.slane %v579, 1
    %v581 = vadd.f32 %v579, %v580
    %s582 = scalar_lea.vmem [#allocation5], 16
    %v583 = vld [vmem:[%s582] sm:$0xff]
    %v584 = vld [vmem:[%s582 + $0x8] sm:$0xff]
    %v586 = vsel %vm64, %v583, 0
    %v589 = vsel %vm64, %v584, 0
    %591 = vmatprep.subr.mxu0 0.0
    %v592 = vand.u32 %v54, 4294901760
    %593 = vmatpush1.msra.mxu0 %v592
    %594 = vmatprep.subr.mxu0 0.0
    %v595 = vand.u32 %v55, 4294901760
    %596 = vmatpush1.msra.mxu0 %v595
    %597 = vmatprep.subr.mxu0 0.0
    %598 = vmatpush1.msra.mxu0 0.0
    %599 = vmatprep.subr.mxu0 0.0
    %600 = vmatpush1.msra.mxu0 0.0
    %601 = vmatprep.subr.mxu0 0.0
    %602 = vmatpush1.msra.mxu0 0.0
    %603 = vmatprep.subr.mxu0 0.0
    %604 = vmatpush1.msra.mxu0 0.0
    %605 = vmatprep.subr.mxu0 0.0
    %606 = vmatpush1.msra.mxu0 0.0
    %607 = vmatprep.subr.mxu0 0.0
    %608 = vmatpush1.msra.mxu0 0.0
    %609 = vmatprep.subr.mxu0 0.0
    %610 = vmatpush1.msra.mxu0 0.0
    %611 = vmatprep.subr.mxu0 0.0
    %612 = vmatpush1.msra.mxu0 0.0
    %613 = vmatprep.subr.mxu0 0.0
    %614 = vmatpush1.msra.mxu0 0.0
    %615 = vmatprep.subr.mxu0 0.0
    %616 = vmatpush1.msra.mxu0 0.0
    %617 = vmatprep.subr.mxu0 0.0
    %618 = vmatpush1.msra.mxu0 0.0
    %619 = vmatprep.subr.mxu0 0.0
    %620 = vmatpush1.msra.mxu0 0.0
    %621 = vmatprep.subr.mxu0 0.0
    %622 = vmatpush1.msra.mxu0 0.0
    %623 = vmatprep.subr.mxu0 0.0
    %624 = vmatpush1.msra.mxu0 0.0
    %625 = vmatprep.subr.mxu0 0.0
    %626 = vmatpush1.msra.mxu0 0.0
    %627 = vmatprep.subr.mxu0 0.0
    %628 = vmatpush1.msra.mxu0 0.0
    %629 = vmatprep.subr.mxu0 0.0
    %630 = vmatpush1.msra.mxu0 0.0
    %631 = vmatprep.subr.mxu0 0.0
    %632 = vmatpush1.msra.mxu0 0.0
    %633 = vmatprep.subr.mxu0 0.0
    %634 = vmatpush1.msra.mxu0 0.0
    %635 = vmatprep.subr.mxu0 0.0
    %636 = vmatpush1.msra.mxu0 0.0
    %637 = vmatprep.subr.mxu0 0.0
    %638 = vmatpush1.msra.mxu0 0.0
    %639 = vmatprep.subr.mxu0 0.0
    %640 = vmatpush1.msra.mxu0 0.0
    %641 = vmatprep.subr.mxu0 0.0
    %642 = vmatpush1.msra.mxu0 0.0
    %643 = vmatprep.subr.mxu0 0.0
    %644 = vmatpush1.msra.mxu0 0.0
    %645 = vmatprep.subr.mxu0 0.0
    %646 = vmatpush1.msra.mxu0 0.0
    %647 = vmatprep.subr.mxu0 0.0
    %648 = vmatpush1.msra.mxu0 0.0
    %649 = vmatprep.subr.mxu0 0.0
    %650 = vmatpush1.msra.mxu0 0.0
    %651 = vmatprep.subr.mxu0 0.0
    %652 = vmatpush1.msra.mxu0 0.0
    %653 = vmatprep.subr.mxu0 0.0
    %654 = vmatpush1.msra.mxu0 0.0
    %655 = vmatprep.subr.mxu0 0.0
    %656 = vmatpush1.msra.mxu0 0.0
    %657 = vmatprep.mubr.f32.mxu0 0.0
    %v658 = vand.u32 %v586, 4294901760
    %v659 = vsub.f32 %v586, %v658
    %v660 = vand.u32 %v659, 4294901760
    %v661 = vsub.f32 %v659, %v660
    %v662 = vand.u32 %v661, 4294901760
    %663 = vmatmul.mubr.f32.gmra.mrb[0].mxu0 %v662
    %v664 = vpop.f32.mrb[0].mxu0
    %v665 = vadd.f32 0.0, %v664
    %v666 = vpop.f32.mrb[0].mxu0
    %667 = vmatprep.mubr.f32.mxu0 0.0
    %v668 = vand.u32 %v589, 4294901760
    %v669 = vsub.f32 %v589, %v668
    %v670 = vand.u32 %v669, 4294901760
    %v671 = vsub.f32 %v669, %v670
    %v672 = vand.u32 %v671, 4294901760
    %673 = vmatmul.mubr.f32.gmra.mrb[0].mxu0 %v672
    %v674 = vpop.f32.mrb[0].mxu0
    %v675 = vadd.f32 0.0, %v674
    %v676 = vpop.f32.mrb[0].mxu0
    %677 = vdwg.mxu0
    %678 = vmatprep.subr.mxu0 0.0
    %v679 = vand.u32 %v54, 4294901760
    %v680 = vsub.f32 %v54, %v679
    %v681 = vand.u32 %v680, 4294901760
    %v682 = vsub.f32 %v680, %v681
    %v683 = vand.u32 %v682, 4294901760
    %684 = vmatpush1.msra.mxu0 %v683
    %685 = vmatprep.subr.mxu0 0.0
    %v686 = vand.u32 %v55, 4294901760
    %v687 = vsub.f32 %v55, %v686
    %v688 = vand.u32 %v687, 4294901760
    %v689 = vsub.f32 %v687, %v688
    %v690 = vand.u32 %v689, 4294901760
    %691 = vmatpush1.msra.mxu0 %v690
    %692 = vmatprep.subr.mxu0 0.0
    %693 = vmatpush1.msra.mxu0 0.0
    %694 = vmatprep.subr.mxu0 0.0
    %695 = vmatpush1.msra.mxu0 0.0
    %696 = vmatprep.subr.mxu0 0.0
    %697 = vmatpush1.msra.mxu0 0.0
    %698 = vmatprep.subr.mxu0 0.0
    %699 = vmatpush1.msra.mxu0 0.0
    %700 = vmatprep.subr.mxu0 0.0
    %701 = vmatpush1.msra.mxu0 0.0
    %702 = vmatprep.subr.mxu0 0.0
    %703 = vmatpush1.msra.mxu0 0.0
    %704 = vmatprep.subr.mxu0 0.0
    %705 = vmatpush1.msra.mxu0 0.0
    %706 = vmatprep.subr.mxu0 0.0
    %707 = vmatpush1.msra.mxu0 0.0
    %708 = vmatprep.subr.mxu0 0.0
    %709 = vmatpush1.msra.mxu0 0.0
    %710 = vmatprep.subr.mxu0 0.0
    %711 = vmatpush1.msra.mxu0 0.0
    %712 = vmatprep.subr.mxu0 0.0
    %713 = vmatpush1.msra.mxu0 0.0
    %714 = vmatprep.subr.mxu0 0.0
    %715 = vmatpush1.msra.mxu0 0.0
    %716 = vmatprep.subr.mxu0 0.0
    %717 = vmatpush1.msra.mxu0 0.0
    %718 = vmatprep.subr.mxu0 0.0
    %719 = vmatpush1.msra.mxu0 0.0
    %720 = vmatprep.subr.mxu0 0.0
    %721 = vmatpush1.msra.mxu0 0.0
    %722 = vmatprep.subr.mxu0 0.0
    %723 = vmatpush1.msra.mxu0 0.0
    %724 = vmatprep.subr.mxu0 0.0
    %725 = vmatpush1.msra.mxu0 0.0
    %726 = vmatprep.subr.mxu0 0.0
    %727 = vmatpush1.msra.mxu0 0.0
    %728 = vmatprep.subr.mxu0 0.0
    %729 = vmatpush1.msra.mxu0 0.0
    %730 = vmatprep.subr.mxu0 0.0
    %731 = vmatpush1.msra.mxu0 0.0
    %732 = vmatprep.subr.mxu0 0.0
    %733 = vmatpush1.msra.mxu0 0.0
    %734 = vmatprep.subr.mxu0 0.0
    %735 = vmatpush1.msra.mxu0 0.0
    %736 = vmatprep.subr.mxu0 0.0
    %737 = vmatpush1.msra.mxu0 0.0
    %738 = vmatprep.subr.mxu0 0.0
    %739 = vmatpush1.msra.mxu0 0.0
    %740 = vmatprep.subr.mxu0 0.0
    %741 = vmatpush1.msra.mxu0 0.0
    %742 = vmatprep.subr.mxu0 0.0
    %743 = vmatpush1.msra.mxu0 0.0
    %744 = vmatprep.subr.mxu0 0.0
    %745 = vmatpush1.msra.mxu0 0.0
    %746 = vmatprep.subr.mxu0 0.0
    %747 = vmatpush1.msra.mxu0 0.0
    %748 = vmatprep.subr.mxu0 0.0
    %749 = vmatpush1.msra.mxu0 0.0
    %750 = vmatprep.subr.mxu0 0.0
    %751 = vmatpush1.msra.mxu0 0.0
    %752 = vmatprep.mubr.f32.mxu0 0.0
    %v753 = vand.u32 %v586, 4294901760
    %754 = vmatmul.mubr.f32.gmra.mrb[0].mxu0 %v753
    %v755 = vpop.f32.mrb[0].mxu0
    %v756 = vadd.f32 %v665, %v755
    %v757 = vpop.f32.mrb[0].mxu0
    %758 = vmatprep.mubr.f32.mxu0 0.0
    %v759 = vand.u32 %v589, 4294901760
    %760 = vmatmul.mubr.f32.gmra.mrb[0].mxu0 %v759
    %v761 = vpop.f32.mrb[0].mxu0
    %v762 = vadd.f32 %v675, %v761
    %v763 = vpop.f32.mrb[0].mxu0
    %764 = vdwg.mxu0
    %765 = vmatprep.subr.mxu0 0.0
    %v766 = vand.u32 %v54, 4294901760
    %v767 = vsub.f32 %v54, %v766
    %768 = vmatpush1.msra.mxu0 %v767
    %769 = vmatprep.subr.mxu0 0.0
    %v770 = vand.u32 %v55, 4294901760
    %v771 = vsub.f32 %v55, %v770
    %772 = vmatpush1.msra.mxu0 %v771
    %773 = vmatprep.subr.mxu0 0.0
    %774 = vmatpush1.msra.mxu0 0.0
    %775 = vmatprep.subr.mxu0 0.0
    %776 = vmatpush1.msra.mxu0 0.0
    %777 = vmatprep.subr.mxu0 0.0
    %778 = vmatpush1.msra.mxu0 0.0
    %779 = vmatprep.subr.mxu0 0.0
    %780 = vmatpush1.msra.mxu0 0.0
    %781 = vmatprep.subr.mxu0 0.0
    %782 = vmatpush1.msra.mxu0 0.0
    %783 = vmatprep.subr.mxu0 0.0
    %784 = vmatpush1.msra.mxu0 0.0
    %785 = vmatprep.subr.mxu0 0.0
    %786 = vmatpush1.msra.mxu0 0.0
    %787 = vmatprep.subr.mxu0 0.0
    %788 = vmatpush1.msra.mxu0 0.0
    %789 = vmatprep.subr.mxu0 0.0
    %790 = vmatpush1.msra.mxu0 0.0
    %791 = vmatprep.subr.mxu0 0.0
    %792 = vmatpush1.msra.mxu0 0.0
    %793 = vmatprep.subr.mxu0 0.0
    %794 = vmatpush1.msra.mxu0 0.0
    %795 = vmatprep.subr.mxu0 0.0
    %796 = vmatpush1.msra.mxu0 0.0
    %797 = vmatprep.subr.mxu0 0.0
    %798 = vmatpush1.msra.mxu0 0.0
    %799 = vmatprep.subr.mxu0 0.0
    %800 = vmatpush1.msra.mxu0 0.0
    %801 = vmatprep.subr.mxu0 0.0
    %802 = vmatpush1.msra.mxu0 0.0
    %803 = vmatprep.subr.mxu0 0.0
    %804 = vmatpush1.msra.mxu0 0.0
    %805 = vmatprep.subr.mxu0 0.0
    %806 = vmatpush1.msra.mxu0 0.0
    %807 = vmatprep.subr.mxu0 0.0
    %808 = vmatpush1.msra.mxu0 0.0
    %809 = vmatprep.subr.mxu0 0.0
    %810 = vmatpush1.msra.mxu0 0.0
    %811 = vmatprep.subr.mxu0 0.0
    %812 = vmatpush1.msra.mxu0 0.0
    %813 = vmatprep.subr.mxu0 0.0
    %814 = vmatpush1.msra.mxu0 0.0
    %815 = vmatprep.subr.mxu0 0.0
    %816 = vmatpush1.msra.mxu0 0.0
    %817 = vmatprep.subr.mxu0 0.0
    %818 = vmatpush1.msra.mxu0 0.0
    %819 = vmatprep.subr.mxu0 0.0
    %820 = vmatpush1.msra.mxu0 0.0
    %821 = vmatprep.subr.mxu0 0.0
    %822 = vmatpush1.msra.mxu0 0.0
    %823 = vmatprep.subr.mxu0 0.0
    %824 = vmatpush1.msra.mxu0 0.0
    %825 = vmatprep.subr.mxu0 0.0
    %826 = vmatpush1.msra.mxu0 0.0
    %827 = vmatprep.subr.mxu0 0.0
    %828 = vmatpush1.msra.mxu0 0.0
    %829 = vmatprep.subr.mxu0 0.0
    %830 = vmatpush1.msra.mxu0 0.0
    %831 = vmatprep.subr.mxu0 0.0
    %832 = vmatpush1.msra.mxu0 0.0
    %833 = vmatprep.mubr.f32.mxu0 0.0
    %v834 = vand.u32 %v586, 4294901760
    %v835 = vsub.f32 %v586, %v834
    %836 = vmatmul.mubr.f32.gmra.mrb[0].mxu0 %v835
    %v837 = vpop.f32.mrb[0].mxu0
    %v838 = vadd.f32 %v756, %v837
    %v839 = vpop.f32.mrb[0].mxu0
    %840 = vmatprep.mubr.f32.mxu0 0.0
    %v841 = vand.u32 %v589, 4294901760
    %v842 = vsub.f32 %v589, %v841
    %843 = vmatmul.mubr.f32.gmra.mrb[0].mxu0 %v842
    %v844 = vpop.f32.mrb[0].mxu0
    %v845 = vadd.f32 %v762, %v844
    %v846 = vpop.f32.mrb[0].mxu0
    %847 = vdwg.mxu0
    %848 = vmatprep.subr.mxu0 0.0
    %v849 = vand.u32 %v54, 4294901760
    %850 = vmatpush1.msra.mxu0 %v849
    %851 = vmatprep.subr.mxu0 0.0
    %v852 = vand.u32 %v55, 4294901760
    %853 = vmatpush1.msra.mxu0 %v852
    %854 = vmatprep.subr.mxu0 0.0
    %855 = vmatpush1.msra.mxu0 0.0
    %856 = vmatprep.subr.mxu0 0.0
    %857 = vmatpush1.msra.mxu0 0.0
    %858 = vmatprep.subr.mxu0 0.0
    %859 = vmatpush1.msra.mxu0 0.0
    %860 = vmatprep.subr.mxu0 0.0
    %861 = vmatpush1.msra.mxu0 0.0
    %862 = vmatprep.subr.mxu0 0.0
    %863 = vmatpush1.msra.mxu0 0.0
    %864 = vmatprep.subr.mxu0 0.0
    %865 = vmatpush1.msra.mxu0 0.0
    %866 = vmatprep.subr.mxu0 0.0
    %867 = vmatpush1.msra.mxu0 0.0
    %868 = vmatprep.subr.mxu0 0.0
    %869 = vmatpush1.msra.mxu0 0.0
    %870 = vmatprep.subr.mxu0 0.0
    %871 = vmatpush1.msra.mxu0 0.0
    %872 = vmatprep.subr.mxu0 0.0
    %873 = vmatpush1.msra.mxu0 0.0
    %874 = vmatprep.subr.mxu0 0.0
    %875 = vmatpush1.msra.mxu0 0.0
    %876 = vmatprep.subr.mxu0 0.0
    %877 = vmatpush1.msra.mxu0 0.0
    %878 = vmatprep.subr.mxu0 0.0
    %879 = vmatpush1.msra.mxu0 0.0
    %880 = vmatprep.subr.mxu0 0.0
    %881 = vmatpush1.msra.mxu0 0.0
    %882 = vmatprep.subr.mxu0 0.0
    %883 = vmatpush1.msra.mxu0 0.0
    %884 = vmatprep.subr.mxu0 0.0
    %885 = vmatpush1.msra.mxu0 0.0
    %886 = vmatprep.subr.mxu0 0.0
    %887 = vmatpush1.msra.mxu0 0.0
    %888 = vmatprep.subr.mxu0 0.0
    %889 = vmatpush1.msra.mxu0 0.0
    %890 = vmatprep.subr.mxu0 0.0
    %891 = vmatpush1.msra.mxu0 0.0
    %892 = vmatprep.subr.mxu0 0.0
    %893 = vmatpush1.msra.mxu0 0.0
    %894 = vmatprep.subr.mxu0 0.0
    %895 = vmatpush1.msra.mxu0 0.0
    %896 = vmatprep.subr.mxu0 0.0
    %897 = vmatpush1.msra.mxu0 0.0
    %898 = vmatprep.subr.mxu0 0.0
    %899 = vmatpush1.msra.mxu0 0.0
    %900 = vmatprep.subr.mxu0 0.0
    %901 = vmatpush1.msra.mxu0 0.0
    %902 = vmatprep.subr.mxu0 0.0
    %903 = vmatpush1.msra.mxu0 0.0
    %904 = vmatprep.subr.mxu0 0.0
    %905 = vmatpush1.msra.mxu0 0.0
    %906 = vmatprep.subr.mxu0 0.0
    %907 = vmatpush1.msra.mxu0 0.0
    %908 = vmatprep.subr.mxu0 0.0
    %909 = vmatpush1.msra.mxu0 0.0
    %910 = vmatprep.subr.mxu0 0.0
    %911 = vmatpush1.msra.mxu0 0.0
    %912 = vmatprep.subr.mxu0 0.0
    %913 = vmatpush1.msra.mxu0 0.0
    %914 = vmatprep.mubr.f32.mxu0 0.0
    %v915 = vand.u32 %v586, 4294901760
    %v916 = vsub.f32 %v586, %v915
    %v917 = vand.u32 %v916, 4294901760
    %918 = vmatmul.mubr.f32.gmra.mrb[0].mxu0 %v917
    %v919 = vpop.f32.mrb[0].mxu0
    %v920 = vadd.f32 %v838, %v919
    %v921 = vpop.f32.mrb[0].mxu0
    %922 = vmatprep.mubr.f32.mxu0 0.0
    %v923 = vand.u32 %v589, 4294901760
    %v924 = vsub.f32 %v589, %v923
    %v925 = vand.u32 %v924, 4294901760
    %926 = vmatmul.mubr.f32.gmra.mrb[0].mxu0 %v925
    %v927 = vpop.f32.mrb[0].mxu0
    %v928 = vadd.f32 %v845, %v927
    %v929 = vpop.f32.mrb[0].mxu0
    %930 = vdwg.mxu0
    %931 = vmatprep.subr.mxu0 0.0
    %v932 = vand.u32 %v54, 4294901760
    %v933 = vsub.f32 %v54, %v932
    %v934 = vand.u32 %v933, 4294901760
    %935 = vmatpush1.msra.mxu0 %v934
    %936 = vmatprep.subr.mxu0 0.0
    %v937 = vand.u32 %v55, 4294901760
    %v938 = vsub.f32 %v55, %v937
    %v939 = vand.u32 %v938, 4294901760
    %940 = vmatpush1.msra.mxu0 %v939
    %941 = vmatprep.subr.mxu0 0.0
    %942 = vmatpush1.msra.mxu0 0.0
    %943 = vmatprep.subr.mxu0 0.0
    %944 = vmatpush1.msra.mxu0 0.0
    %945 = vmatprep.subr.mxu0 0.0
    %946 = vmatpush1.msra.mxu0 0.0
    %947 = vmatprep.subr.mxu0 0.0
    %948 = vmatpush1.msra.mxu0 0.0
    %949 = vmatprep.subr.mxu0 0.0
    %950 = vmatpush1.msra.mxu0 0.0
    %951 = vmatprep.subr.mxu0 0.0
    %952 = vmatpush1.msra.mxu0 0.0
    %953 = vmatprep.subr.mxu0 0.0
    %954 = vmatpush1.msra.mxu0 0.0
    %955 = vmatprep.subr.mxu0 0.0
    %956 = vmatpush1.msra.mxu0 0.0
    %957 = vmatprep.subr.mxu0 0.0
    %958 = vmatpush1.msra.mxu0 0.0
    %959 = vmatprep.subr.mxu0 0.0
    %960 = vmatpush1.msra.mxu0 0.0
    %961 = vmatprep.subr.mxu0 0.0
    %962 = vmatpush1.msra.mxu0 0.0
    %963 = vmatprep.subr.mxu0 0.0
    %964 = vmatpush1.msra.mxu0 0.0
    %965 = vmatprep.subr.mxu0 0.0
    %966 = vmatpush1.msra.mxu0 0.0
    %967 = vmatprep.subr.mxu0 0.0
    %968 = vmatpush1.msra.mxu0 0.0
    %969 = vmatprep.subr.mxu0 0.0
    %970 = vmatpush1.msra.mxu0 0.0
    %971 = vmatprep.subr.mxu0 0.0
    %972 = vmatpush1.msra.mxu0 0.0
    %973 = vmatprep.subr.mxu0 0.0
    %974 = vmatpush1.msra.mxu0 0.0
    %975 = vmatprep.subr.mxu0 0.0
    %976 = vmatpush1.msra.mxu0 0.0
    %977 = vmatprep.subr.mxu0 0.0
    %978 = vmatpush1.msra.mxu0 0.0
    %979 = vmatprep.subr.mxu0 0.0
    %980 = vmatpush1.msra.mxu0 0.0
    %981 = vmatprep.subr.mxu0 0.0
    %982 = vmatpush1.msra.mxu0 0.0
    %983 = vmatprep.subr.mxu0 0.0
    %984 = vmatpush1.msra.mxu0 0.0
    %985 = vmatprep.subr.mxu0 0.0
    %986 = vmatpush1.msra.mxu0 0.0
    %987 = vmatprep.subr.mxu0 0.0
    %988 = vmatpush1.msra.mxu0 0.0
    %989 = vmatprep.subr.mxu0 0.0
    %990 = vmatpush1.msra.mxu0 0.0
    %991 = vmatprep.subr.mxu0 0.0
    %992 = vmatpush1.msra.mxu0 0.0
    %993 = vmatprep.subr.mxu0 0.0
    %994 = vmatpush1.msra.mxu0 0.0
    %995 = vmatprep.subr.mxu0 0.0
    %996 = vmatpush1.msra.mxu0 0.0
    %997 = vmatprep.subr.mxu0 0.0
    %998 = vmatpush1.msra.mxu0 0.0
    %999 = vmatprep.subr.mxu0 0.0
    %1000 = vmatpush1.msra.mxu0 0.0
    %1001 = vmatprep.mubr.f32.mxu0 0.0
    %v1002 = vand.u32 %v586, 4294901760
    %1003 = vmatmul.mubr.f32.gmra.mrb[0].mxu0 %v1002
    %v1004 = vpop.f32.mrb[0].mxu0
    %v1005 = vadd.f32 %v920, %v1004
    %v1006 = vpop.f32.mrb[0].mxu0
    %1007 = vmatprep.mubr.f32.mxu0 0.0
    %v1008 = vand.u32 %v589, 4294901760
    %1009 = vmatmul.mubr.f32.gmra.mrb[0].mxu0 %v1008
    %v1010 = vpop.f32.mrb[0].mxu0
    %v1011 = vadd.f32 %v928, %v1010
    %v1012 = vpop.f32.mrb[0].mxu0
    %1013 = vdwg.mxu0
    %1014 = vmatprep.subr.mxu0 0.0
    %v1015 = vand.u32 %v54, 4294901760
    %1016 = vmatpush1.msra.mxu0 %v1015
    %1017 = vmatprep.subr.mxu0 0.0
    %v1018 = vand.u32 %v55, 4294901760
    %1019 = vmatpush1.msra.mxu0 %v1018
    %1020 = vmatprep.subr.mxu0 0.0
    %1021 = vmatpush1.msra.mxu0 0.0
    %1022 = vmatprep.subr.mxu0 0.0
    %1023 = vmatpush1.msra.mxu0 0.0
    %1024 = vmatprep.subr.mxu0 0.0
    %1025 = vmatpush1.msra.mxu0 0.0
    %1026 = vmatprep.subr.mxu0 0.0
    %1027 = vmatpush1.msra.mxu0 0.0
    %1028 = vmatprep.subr.mxu0 0.0
    %1029 = vmatpush1.msra.mxu0 0.0
    %1030 = vmatprep.subr.mxu0 0.0
    %1031 = vmatpush1.msra.mxu0 0.0
    %1032 = vmatprep.subr.mxu0 0.0
    %1033 = vmatpush1.msra.mxu0 0.0
    %1034 = vmatprep.subr.mxu0 0.0
    %1035 = vmatpush1.msra.mxu0 0.0
    %1036 = vmatprep.subr.mxu0 0.0
    %1037 = vmatpush1.msra.mxu0 0.0
    %1038 = vmatprep.subr.mxu0 0.0
    %1039 = vmatpush1.msra.mxu0 0.0
    %1040 = vmatprep.subr.mxu0 0.0
    %1041 = vmatpush1.msra.mxu0 0.0
    %1042 = vmatprep.subr.mxu0 0.0
    %1043 = vmatpush1.msra.mxu0 0.0
    %1044 = vmatprep.subr.mxu0 0.0
    %1045 = vmatpush1.msra.mxu0 0.0
    %1046 = vmatprep.subr.mxu0 0.0
    %1047 = vmatpush1.msra.mxu0 0.0
    %1048 = vmatprep.subr.mxu0 0.0
    %1049 = vmatpush1.msra.mxu0 0.0
    %1050 = vmatprep.subr.mxu0 0.0
    %1051 = vmatpush1.msra.mxu0 0.0
    %1052 = vmatprep.subr.mxu0 0.0
    %1053 = vmatpush1.msra.mxu0 0.0
    %1054 = vmatprep.subr.mxu0 0.0
    %1055 = vmatpush1.msra.mxu0 0.0
    %1056 = vmatprep.subr.mxu0 0.0
    %1057 = vmatpush1.msra.mxu0 0.0
    %1058 = vmatprep.subr.mxu0 0.0
    %1059 = vmatpush1.msra.mxu0 0.0
    %1060 = vmatprep.subr.mxu0 0.0
    %1061 = vmatpush1.msra.mxu0 0.0
    %1062 = vmatprep.subr.mxu0 0.0
    %1063 = vmatpush1.msra.mxu0 0.0
    %1064 = vmatprep.subr.mxu0 0.0
    %1065 = vmatpush1.msra.mxu0 0.0
    %1066 = vmatprep.subr.mxu0 0.0
    %1067 = vmatpush1.msra.mxu0 0.0
    %1068 = vmatprep.subr.mxu0 0.0
    %1069 = vmatpush1.msra.mxu0 0.0
    %1070 = vmatprep.subr.mxu0 0.0
    %1071 = vmatpush1.msra.mxu0 0.0
    %1072 = vmatprep.subr.mxu0 0.0
    %1073 = vmatpush1.msra.mxu0 0.0
    %1074 = vmatprep.subr.mxu0 0.0
    %1075 = vmatpush1.msra.mxu0 0.0
    %1076 = vmatprep.subr.mxu0 0.0
    %1077 = vmatpush1.msra.mxu0 0.0
    %1078 = vmatprep.subr.mxu0 0.0
    %1079 = vmatpush1.msra.mxu0 0.0
    %1080 = vmatprep.mubr.f32.mxu0 0.0
    %v1081 = vand.u32 %v586, 4294901760
    %1082 = vmatmul.mubr.f32.gmra.mrb[0].mxu0 %v1081
    %v1083 = vpop.f32.mrb[0].mxu0
    %v1084 = vadd.f32 %v1005, %v1083
    %v1085 = vpop.f32.mrb[0].mxu0
    %1086 = vmatprep.mubr.f32.mxu0 0.0
    %v1087 = vand.u32 %v589, 4294901760
    %1088 = vmatmul.mubr.f32.gmra.mrb[0].mxu0 %v1087
    %v1089 = vpop.f32.mrb[0].mxu0
    %v1090 = vadd.f32 %v1011, %v1089
    %v1091 = vpop.f32.mrb[0].mxu0
    %1092 = vdwg.mxu0
    %v1093 = vsel %vm60, %v1084, 0.0
    %v1094 = vsel %vm61, %v1090, 0.0
    %v1095 = vadd.f32 %v1093, %v1094
    %v1096 = vrot.slane %v1095, 4
    %v1097 = vadd.f32 %v1095, %v1096
    %v1098 = vrot.slane %v1097, 2
    %v1099 = vadd.f32 %v1097, %v1098
    %v1100 = vrot.slane %v1099, 1
    %v1101 = vadd.f32 %v1099, %v1100
    %vm1102 = vcmask 1040384
    %v1103 = vsel %vm1102, %v581, %v1101
    %1104 = vst [vmem:[#allocation7] sm:$0x3] %v1103
    // Predicated region
    $region22: #{tpu_custom_call.1} parent=1 // pred_check
      _
    $region23: #{tpu_custom_call.1} parent=1 // pred_check_branch
      %1106 = sbr.rel (0) target = $region25
    $region24: #{tpu_custom_call.1} parent=1 // pred_region
      %s1108 = ssub.s32 32, 32
      %1109 = vsyncadd [#allocation4], %s1108
      %s1111 = sshll.u32 [#allocation7], 4
      %s1112 = int_to_ptr.vmem [resolvable:$true] %s1111
      %1114 = dma.vmem_to_hbm [thread:$0]  %s1112, 32, %s3, [#allocation4]
    $region25: #{tpu_custom_call.1} parent=1 // pred_fallthru
      _
    // Predicated region
    $region26: #{tpu_custom_call.1} parent=1 // pred_check
      _
    $region27: #{tpu_custom_call.1} parent=1 // pred_check_branch
      %1116 = sbr.rel (0) target = $region29
    $region28: #{tpu_custom_call.1} parent=1 // pred_region
      %1117 = dma.done [#allocation4], 32
    $region29: #{tpu_custom_call.1} parent=1 // pred_fallthru
      _
    %1118 = vsyncpa [#allocation3], 1
    %1119 = vsyncpa [#allocation6], 1
    %1120 = vsyncpa [#allocation4], 1

</llo_original>
